<compile_context>
chip_gen: v7x
topology: tpu7x:2x2x1
jax: 0.10.0
libtpu: 0.0.40
codegen_flags: <defaults>
</compile_context>

<pallas_src>
import functools

import jax
import jax.numpy as jnp
from jax import lax
from jax.experimental import pallas as pl
from jax.experimental.pallas import tpu as pltpu


def _default_budgets():
    """(max_block_bytes, vmem_limit_bytes) sized per TPU generation."""
    vmem_cap = None
    try:
        vmem_cap = int(pltpu.get_tpu_info().vmem_capacity_bytes)
    except Exception:
        vmem_cap = None
    if vmem_cap is not None and vmem_cap >= 96 * 1024 * 1024:
        # v5e / v6e: 128 MiB physical VMEM -> big tiles, raised scoped limit.
        return 16 * 1024 * 1024, 96 * 1024 * 1024
    # v7x (64 MiB per TensorCore) or unknown: keep 2x(in)+2x(out) blocks + slack
    # well under the physical cap (4 * 12 MiB = 48 MiB < 56 MiB limit).
    return 12 * 1024 * 1024, 56 * 1024 * 1024


def _shifted(xc, TR, W, aligned):
    """Neighbour tiles x[r-1], x[r+1], x[c-1], x[c+1] (wrapped or zero-filled)."""
    if aligned:
        # Lane/sublane-aligned tile: cheap XLU rotations (wrapped edges are
        # fixed up by the multiplicative masks / halo rows in the caller).
        up = pltpu.roll(xc, 1, axis=0)
        down = pltpu.roll(xc, TR - 1, axis=0)
        left = pltpu.roll(xc, 1, axis=1)
        right = pltpu.roll(xc, W - 1, axis=1)
    else:
        # Tiny / unaligned tile (e.g. W=16): zero-fill shifts.  Perf is moot.
        # TODO(synk): for production workloads with W < 128, repack k=128/W image
        # rows per lane row (periodic col masks) to get lane-dense stores.
        zrow = jnp.zeros((1, W), xc.dtype)
        zcol = jnp.zeros((TR, 1), xc.dtype)
        if TR > 1:
            up = jnp.concatenate([zrow, xc[:-1, :]], axis=0)
            down = jnp.concatenate([xc[1:, :], zrow], axis=0)
        else:
            up = zrow
            down = zrow
        if W > 1:
            left = jnp.concatenate([zcol, xc[:, :-1]], axis=1)
            right = jnp.concatenate([xc[:, 1:], zcol], axis=1)
        else:
            left = zcol
            right = zcol
    return up, down, left, right


def _lap_kernel_whole(x_ref, o_ref, *, H, TR, W, inv_dx2, aligned):
    """Tile holds whole image(s): all boundaries are constant masks, no halo."""
    x = x_ref[...]
    cdt = jnp.float32 if x.dtype.itemsize < 4 else x.dtype
    xc = x.astype(cdt)
    up, down, left, right = _shifted(xc, TR, W, aligned)

    # Masks built in-kernel (no captured constants); inv_dx2 folded into them.
    col = lax.broadcasted_iota(jnp.int32, (1, W), 1)
    row = lax.broadcasted_iota(jnp.int32, (TR, 1), 0)
    kl = jnp.where(col != 0, inv_dx2, 0.0).astype(cdt)
    kr = jnp.where(col != W - 1, inv_dx2, 0.0).astype(cdt)
    ku = jnp.where(row % H != 0, inv_dx2, 0.0).astype(cdt)
    kd = jnp.where(row % H != H - 1, inv_dx2, 0.0).astype(cdt)

    out = (up * ku + down * kd + left * kl + right * kr
           + xc * (-4.0 * inv_dx2))
    o_ref[...] = out.astype(o_ref.dtype)


def _lap_kernel_halo(x_ref, x_hbm, o_ref, halo_top, halo_bot, sems, *,
                     H, TR, W, inv_dx2, aligned):
    """Tile is an interior slice of one image: 1-row halos fetched from HBM."""
    t = pl.program_id(0)
    tiles_per_img = H // TR
    needs_top = lax.rem(t, tiles_per_img) != 0
    needs_bot = lax.rem(t + 1, tiles_per_img) != 0

    # Kick the 1-row halo DMAs off FIRST so their latency hides under the
    # shifts / mask compute below (perf review: de-serialize start();wait()).
    @pl.when(needs_top)
    def _():
        pltpu.make_async_copy(x_hbm.at[pl.ds(t * TR - 1, 1), :],
                              halo_top, sems.at[0]).start()

    @pl.when(jnp.logical_not(needs_top))
    def _():
        halo_top[...] = jnp.zeros_like(halo_top)

    @pl.when(needs_bot)
    def _():
        pltpu.make_async_copy(x_hbm.at[pl.ds(t * TR + TR, 1), :],
                              halo_bot, sems.at[1]).start()

    @pl.when(jnp.logical_not(needs_bot))
    def _():
        halo_bot[...] = jnp.zeros_like(halo_bot)

    x = x_ref[...]
    cdt = jnp.float32 if x.dtype.itemsize < 4 else x.dtype
    xc = x.astype(cdt)
    up, down, left, right = _shifted(xc, TR, W, aligned)

    col = lax.broadcasted_iota(jnp.int32, (1, W), 1)
    row = lax.broadcasted_iota(jnp.int32, (TR, 1), 0)
    kl = jnp.where(col != 0, inv_dx2, 0.0).astype(cdt)
    kr = jnp.where(col != W - 1, inv_dx2, 0.0).astype(cdt)
    ku = jnp.where(row != 0, inv_dx2, 0.0).astype(cdt)        # interior rows
    kd = jnp.where(row != TR - 1, inv_dx2, 0.0).astype(cdt)
    su = jnp.where(row == 0, inv_dx2, 0.0).astype(cdt)        # halo blend rows
    sd = jnp.where(row == TR - 1, inv_dx2, 0.0).astype(cdt)

    partial = (up * ku + down * kd + left * kl + right * kr
               + xc * (-4.0 * inv_dx2))

    # Only now block on the halo rows.
    @pl.when(needs_top)
    def _():
        pltpu.make_async_copy(x_hbm.at[pl.ds(t * TR - 1, 1), :],
                              halo_top, sems.at[0]).wait()

    @pl.when(needs_bot)
    def _():
        pltpu.make_async_copy(x_hbm.at[pl.ds(t * TR + TR, 1), :],
                              halo_bot, sems.at[1]).wait()

    out = (partial
           + halo_top[...].astype(cdt) * su
           + halo_bot[...].astype(cdt) * sd)
    o_ref[...] = out.astype(o_ref.dtype)


def _choose_rows(n_images, H, max_rows, *, sub_mult=8, min_grid=2):
    """Rows per tile: whole-image multiple of H, or a divisor of H.

    Prefers (a) keeping the grid >= min_grid steps (v7x has 2 TensorCores),
    (b) sublane-aligned row counts (dtype-dependent sub_mult), (c) the biggest
    tile that fits the block budget.
    """
    R = n_images * H
    max_rows = max(1, min(int(max_rows), R))

    def best_of(cands):
        pref = [c for c in cands if c % sub_mult == 0] or cands
        return pref[-1] if pref else None

    whole = [tb * H for tb in range(1, max(1, max_rows // H) + 1)
             if tb <= n_images and n_images % tb == 0 and tb * H <= max_rows]
    slices = [tr for tr in range(1, min(H - 1, max_rows) + 1) if H % tr == 0]

    whole2 = [c for c in whole if R // c >= min_grid]
    slices2 = [c for c in slices if R // c >= min_grid]
    for cands in (whole2, slices2, whole, slices):
        tr = best_of(cands)
        if tr is not None:
            return tr
    return 1


def laplacian_filter(x, dx=1.0, *, max_block_bytes=None, max_block_rows=None,
                     vmem_limit_bytes=None):
    """x: (N, 1, H, W) -> (N, 1, H, W); 5-point Laplacian / dx^2, zero padded."""
    N, C, H, W = x.shape
    assert C == 1, "LaplacianFilter has a single input/output channel"
    R = N * H
    x2 = x.reshape(R, W)

    itemsize = x2.dtype.itemsize
    # Sublane packing: f32 rows %8, bf16 %16, int8 %32.
    sub_mult = 8 * max(1, 4 // max(1, itemsize))

    d_block, d_limit = _default_budgets()
    if max_block_bytes is None:
        max_block_bytes = d_block
    if vmem_limit_bytes is None:
        vmem_limit_bytes = d_limit

    cap = max(1, max_block_bytes // max(1, W * itemsize))
    if max_block_rows is not None:
        cap = min(cap, max_block_rows)
    TR = _choose_rows(N, H, cap, sub_mult=sub_mult, min_grid=2)
    grid = (R // TR,)

    # dx is fixed at module construction in the PyTorch spec, so baking the
    # scale in as a static constant is fine (one compile per distinct dx).
    inv_dx2 = float(1.0 / (dx * dx))
    aligned = (W % 128 == 0) and (TR % sub_mult == 0)
    whole = (TR % H == 0)

    cparams = pltpu.CompilerParams(
        # Independent row tiles -> shardable across the two v7x TensorCores;
        # harmless on single-TC v5e/v6e.
        dimension_semantics=("parallel",),
        vmem_limit_bytes=int(vmem_limit_bytes),
    )

    if whole:
        # Whole-image path: no HBM alias, no halo scratch, no semaphores.
        kernel = functools.partial(_lap_kernel_whole, H=H, TR=TR, W=W,
                                   inv_dx2=inv_dx2, aligned=aligned)
        out2 = pl.pallas_call(
            kernel,
            out_shape=jax.ShapeDtypeStruct((R, W), x2.dtype),
            grid_spec=pltpu.PrefetchScalarGridSpec(
                num_scalar_prefetch=0,
                grid=grid,
                in_specs=[pl.BlockSpec((TR, W), lambda t: (t, 0))],
                out_specs=pl.BlockSpec((TR, W), lambda t: (t, 0)),
            ),
            compiler_params=cparams,
        )(x2)
    else:
        # Halo path: tile is a divisor-of-H slice of one image; 1-row halos
        # come from an un-tiled pl.ANY alias of the same input.
        kernel = functools.partial(_lap_kernel_halo, H=H, TR=TR, W=W,
                                   inv_dx2=inv_dx2, aligned=aligned)
        out2 = pl.pallas_call(
            kernel,
            out_shape=jax.ShapeDtypeStruct((R, W), x2.dtype),
            grid_spec=pltpu.PrefetchScalarGridSpec(
                num_scalar_prefetch=0,
                grid=grid,
                in_specs=[
                    pl.BlockSpec((TR, W), lambda t: (t, 0)),   # pipelined tile
                    pl.BlockSpec(memory_space=pl.ANY),         # raw HBM alias
                ],
                out_specs=pl.BlockSpec((TR, W), lambda t: (t, 0)),
                scratch_shapes=[
                    pltpu.VMEM((1, W), x2.dtype),              # top halo row
                    pltpu.VMEM((1, W), x2.dtype),              # bottom halo row
                    pltpu.SemaphoreType.DMA((2,)),
                ],
            ),
            compiler_params=cparams,
        )(x2, x2)

    return out2.reshape(N, 1, H, W)


def _reference(x, dx=1.0):
    """Pure-JAX reference: 3x3 Laplacian conv with zero padding."""
    k = jnp.array([[0.0, 1.0, 0.0],
                   [1.0, -4.0, 1.0],
                   [0.0, 1.0, 0.0]], dtype=x.dtype) / (dx * dx)
    w = k.reshape(1, 1, 3, 3)
    return lax.conv_general_dilated(
        x, w, window_strides=(1, 1), padding=((1, 1), (1, 1)),
        dimension_numbers=("NCHW", "OIHW", "NCHW"),
        precision=lax.Precision.HIGHEST)


if __name__ == "__main__":
    key = jax.random.PRNGKey(0)
    k1, k2, k3 = jax.random.split(key, 3)

    # 1) Module-shaped small input (whole-image packing path, W < 128 fallback).
    x1 = jax.random.normal(k1, (2, 1, 16, 16), dtype=jnp.float32)
    o1 = jax.block_until_ready(laplacian_filter(x1, dx=1.0))
    r1 = _reference(x1, dx=1.0)
    assert o1.shape == r1.shape == (2, 1, 16, 16)
    assert jnp.max(jnp.abs(o1 - r1)) < 1e-5, "mismatch (small image path)"

    # 2) Lane-dense, multi-image-per-block path (roll + in-kernel masks).
    x2 = jax.random.normal(k2, (4, 1, 32, 128), dtype=jnp.float32)
    o2 = jax.block_until_ready(laplacian_filter(x2, dx=0.5))
    r2 = _reference(x2, dx=0.5)
    assert jnp.max(jnp.abs(o2 - r2)) < 1e-4, "mismatch (packed batch path)"

    # 3) Force the H-tiled path used for large images (overlapped halo DMAs).
    x3 = jax.random.normal(k3, (2, 1, 64, 128), dtype=jnp.float32)
    o3 = jax.block_until_ready(laplacian_filter(x3, dx=1.0, max_block_rows=16))
    r3 = _reference(x3, dx=1.0)
    assert jnp.max(jnp.abs(o3 - r3)) < 1e-5, "mismatch (halo-tiled path)"

    print("KERNEL_OK")
</pallas_src>

<mosaic_0001>
module attributes {stable_mosaic.version = 11 : i64} {
  func.func @_lap_kernel_whole(%arg0: i32, %arg1: memref<16x16xf32, #tpu.memory_space<vmem>>, %arg2: memref<16x16xf32, #tpu.memory_space<vmem>>) attributes {dimension_semantics = [#tpu.dimension_semantics<parallel>], iteration_bounds = array<i64: 2>, scalar_prefetch = 0 : i64, scratch_operands = 0 : i64, tpu.core_type = #tpu.core_type<tc>, window_params = [{transform_indices = @transform_0, window_bounds = array<i64: 16, 16>}, {transform_indices = @transform_1, window_bounds = array<i64: 16, 16>}]} {
    %c0 = arith.constant 0 : index
    %c0_0 = arith.constant 0 : index
    %0 = vector.load %arg1[%c0, %c0_0] : memref<16x16xf32, #tpu.memory_space<vmem>>, vector<16x16xf32>
    %cst = arith.constant 0.000000e+00 : f32
    %1 = vector.broadcast %cst : f32 to vector<1x16xf32>
    %cst_1 = arith.constant 0.000000e+00 : f32
    %2 = vector.broadcast %cst_1 : f32 to vector<16x1xf32>
    %3 = vector.extract_strided_slice %0 {offsets = [0, 0], sizes = [15, 16], strides = [1, 1]} : vector<16x16xf32> to vector<15x16xf32>
    %4 = tpu.concatenate %1, %3 in 0 : vector<1x16xf32>, vector<15x16xf32> -> vector<16x16xf32>
    %5 = vector.extract_strided_slice %0 {offsets = [1, 0], sizes = [15, 16], strides = [1, 1]} : vector<16x16xf32> to vector<15x16xf32>
    %6 = tpu.concatenate %5, %1 in 0 : vector<15x16xf32>, vector<1x16xf32> -> vector<16x16xf32>
    %7 = vector.extract_strided_slice %0 {offsets = [0, 0], sizes = [16, 15], strides = [1, 1]} : vector<16x16xf32> to vector<16x15xf32>
    %8 = tpu.concatenate %2, %7 in 1 : vector<16x1xf32>, vector<16x15xf32> -> vector<16x16xf32>
    %9 = vector.extract_strided_slice %0 {offsets = [0, 1], sizes = [16, 15], strides = [1, 1]} : vector<16x16xf32> to vector<16x15xf32>
    %10 = tpu.concatenate %9, %2 in 1 : vector<16x15xf32>, vector<16x1xf32> -> vector<16x16xf32>
    %11 = tpu.iota {dimensions = array<i32: 1>} : vector<1x16xi32>
    %12 = tpu.iota {dimensions = array<i32: 0>} : vector<16x1xi32>
    %c0_i32 = arith.constant 0 : i32
    %13 = vector.broadcast %c0_i32 : i32 to vector<1x16xi32>
    %14 = arith.cmpi ne, %11, %13 : vector<1x16xi32>
    %cst_2 = arith.constant 1.000000e+00 : f32
    %cst_3 = arith.constant 0.000000e+00 : f32
    %15 = vector.broadcast %cst_2 : f32 to vector<1x16xf32>
    %16 = vector.broadcast %cst_3 : f32 to vector<1x16xf32>
    %17 = arith.select %14, %15, %16 : vector<1x16xi1>, vector<1x16xf32>
    %c15_i32 = arith.constant 15 : i32
    %18 = vector.broadcast %c15_i32 : i32 to vector<1x16xi32>
    %19 = arith.cmpi ne, %11, %18 : vector<1x16xi32>
    %cst_4 = arith.constant 1.000000e+00 : f32
    %cst_5 = arith.constant 0.000000e+00 : f32
    %20 = vector.broadcast %cst_4 : f32 to vector<1x16xf32>
    %21 = vector.broadcast %cst_5 : f32 to vector<1x16xf32>
    %22 = arith.select %19, %20, %21 : vector<1x16xi1>, vector<1x16xf32>
    %c16_i32 = arith.constant 16 : i32
    %c0_i32_6 = arith.constant 0 : i32
    %23 = arith.cmpi eq, %c16_i32, %c0_i32_6 : i32
    %c1_i32 = arith.constant 1 : i32
    %24 = arith.select %23, %c1_i32, %c16_i32 : i32
    %25 = vector.broadcast %24 : i32 to vector<16x1xi32>
    %26 = arith.remsi %12, %25 : vector<16x1xi32>
    %c0_i32_7 = arith.constant 0 : i32
    %27 = vector.broadcast %c0_i32_7 : i32 to vector<16x1xi32>
    %28 = arith.cmpi ne, %26, %27 : vector<16x1xi32>
    %c0_i32_8 = arith.constant 0 : i32
    %29 = vector.broadcast %c0_i32_8 : i32 to vector<16x1xi32>
    %30 = arith.cmpi slt, %26, %29 : vector<16x1xi32>
    %c0_i32_9 = arith.constant 0 : i32
    %31 = arith.cmpi slt, %24, %c0_i32_9 : i32
    %32 = vector.broadcast %31 : i1 to vector<16x1xi1>
    %33 = vector.broadcast %32 : vector<16x1xi1> to vector<16x1xi1>
    %34 = arith.xori %30, %33 : vector<16x1xi1>
    %35 = arith.andi %34, %28 : vector<16x1xi1>
    %36 = vector.broadcast %24 : i32 to vector<16x1xi32>
    %37 = arith.addi %26, %36 : vector<16x1xi32>
    %38 = arith.select %35, %37, %26 : vector<16x1xi1>, vector<16x1xi32>
    %c0_i32_10 = arith.constant 0 : i32
    %39 = vector.broadcast %c0_i32_10 : i32 to vector<16x1xi32>
    %40 = arith.cmpi ne, %38, %39 : vector<16x1xi32>
    %cst_11 = arith.constant 1.000000e+00 : f32
    %cst_12 = arith.constant 0.000000e+00 : f32
    %41 = vector.broadcast %cst_11 : f32 to vector<16x1xf32>
    %42 = vector.broadcast %cst_12 : f32 to vector<16x1xf32>
    %43 = arith.select %40, %41, %42 : vector<16x1xi1>, vector<16x1xf32>
    %c16_i32_13 = arith.constant 16 : i32
    %c0_i32_14 = arith.constant 0 : i32
    %44 = arith.cmpi eq, %c16_i32_13, %c0_i32_14 : i32
    %c1_i32_15 = arith.constant 1 : i32
    %45 = arith.select %44, %c1_i32_15, %c16_i32_13 : i32
    %46 = vector.broadcast %45 : i32 to vector<16x1xi32>
    %47 = arith.remsi %12, %46 : vector<16x1xi32>
    %c0_i32_16 = arith.constant 0 : i32
    %48 = vector.broadcast %c0_i32_16 : i32 to vector<16x1xi32>
    %49 = arith.cmpi ne, %47, %48 : vector<16x1xi32>
    %c0_i32_17 = arith.constant 0 : i32
    %50 = vector.broadcast %c0_i32_17 : i32 to vector<16x1xi32>
    %51 = arith.cmpi slt, %47, %50 : vector<16x1xi32>
    %c0_i32_18 = arith.constant 0 : i32
    %52 = arith.cmpi slt, %45, %c0_i32_18 : i32
    %53 = vector.broadcast %52 : i1 to vector<16x1xi1>
    %54 = vector.broadcast %53 : vector<16x1xi1> to vector<16x1xi1>
    %55 = arith.xori %51, %54 : vector<16x1xi1>
    %56 = arith.andi %55, %49 : vector<16x1xi1>
    %57 = vector.broadcast %45 : i32 to vector<16x1xi32>
    %58 = arith.addi %47, %57 : vector<16x1xi32>
    %59 = arith.select %56, %58, %47 : vector<16x1xi1>, vector<16x1xi32>
    %c15_i32_19 = arith.constant 15 : i32
    %60 = vector.broadcast %c15_i32_19 : i32 to vector<16x1xi32>
    %61 = arith.cmpi ne, %59, %60 : vector<16x1xi32>
    %cst_20 = arith.constant 1.000000e+00 : f32
    %cst_21 = arith.constant 0.000000e+00 : f32
    %62 = vector.broadcast %cst_20 : f32 to vector<16x1xf32>
    %63 = vector.broadcast %cst_21 : f32 to vector<16x1xf32>
    %64 = arith.select %61, %62, %63 : vector<16x1xi1>, vector<16x1xf32>
    %65 = vector.broadcast %43 : vector<16x1xf32> to vector<16x16xf32>
    %66 = arith.mulf %4, %65 : vector<16x16xf32>
    %67 = vector.broadcast %64 : vector<16x1xf32> to vector<16x16xf32>
    %68 = arith.mulf %6, %67 : vector<16x16xf32>
    %69 = arith.addf %66, %68 : vector<16x16xf32>
    %70 = vector.broadcast %17 : vector<1x16xf32> to vector<16x16xf32>
    %71 = arith.mulf %8, %70 : vector<16x16xf32>
    %72 = arith.addf %69, %71 : vector<16x16xf32>
    %73 = vector.broadcast %22 : vector<1x16xf32> to vector<16x16xf32>
    %74 = arith.mulf %10, %73 : vector<16x16xf32>
    %75 = arith.addf %72, %74 : vector<16x16xf32>
    %cst_22 = arith.constant -4.000000e+00 : f32
    %76 = vector.broadcast %cst_22 : f32 to vector<16x16xf32>
    %77 = arith.mulf %0, %76 : vector<16x16xf32>
    %78 = arith.addf %75, %77 : vector<16x16xf32>
    %c0_23 = arith.constant 0 : index
    %c0_24 = arith.constant 0 : index
    %79 = vector.load %arg2[%c0_23, %c0_24] : memref<16x16xf32, #tpu.memory_space<vmem>>, vector<16x16xf32>
    tpu.vector_store %arg2[%c0_23, %c0_24], %78 {strides = array<i32>} : memref<16x16xf32, #tpu.memory_space<vmem>>, vector<16x16xf32>,
    return
  }
  func.func @transform_0(%arg0: i32) -> (i32, i32) {
    %c0_i32 = arith.constant 0 : i32
    %c0_i32_0 = arith.constant 0 : i32
    return %arg0, %c0_i32 : i32, i32
  }
  func.func @transform_1(%arg0: i32) -> (i32, i32) {
    %c0_i32 = arith.constant 0 : i32
    %c0_i32_0 = arith.constant 0 : i32
    return %arg0, %c0_i32 : i32, i32
  }
}

</mosaic_0001>

<llo_original>
// kernel: tpu_custom_call.1
$region0: #{tpu_custom_call.1}
  #allocation0 [shape = 'u32[]', space=smem, size = 0x4, offset = 0x4, fixed_abs, tag = 'smem constant byte address 0x4 - core index']
  #allocation1 [shape = 'u32[144,128]{1,0:T(1,128)}', space=vmem, size = 0x12000, scoped, tag = 'internal scratch']
  %s0 = inlined_call_operand.vmem [shape: f32[32,16], index: 0, kind: input, shape index: {}]
  %s1 = inlined_call_operand.vmem [shape: f32[32,16], index: 1, kind: output, shape index: {}]
  %s2 = sld [smem:[#allocation0]]
  $region37: #{tpu_custom_call.1} parent=0
    _
  %s4 = ssub.s32 1, %s2
  %s5 = scalar_select 0, %s4, %s2
  loop: start=0, step=1, limit=4
  $region2: #{tpu_custom_call.1} parent=0 // loop_pre_header
    _
  $region3: #{tpu_custom_call.1} parent=0 // loop_header
    %s7 = sphi 0, %s11
    %p8 = scmp.ge.s32.totalorder %s7, 4
    %s17 = sphi 0, %s19
    %s20 = sphi 0, %s17
    %s21 = sphi 0, %s20
    %s37 = sphi 0, %s21
    %s43 = sphi 0, %s45
    %s46 = sphi 0, %s43
    %s47 = sphi 0, %s46
    %s63 = sphi 0, %s47
  $region4: #{tpu_custom_call.1} parent=0 // loop_header_branch
    %10 = sbr.rel (%p8) target = $region8
  $region5: #{tpu_custom_call.1} parent=0 // loop_body
    %s12 = ssub.s32 %s7, 1
    %s13 = ssub.s32 %s7, 2
    %s14 = sadd.s32 %s7, 1
    %s15 = ssub.s32 %s7, %s14
    %p16 = scmp.eq.s32.totalorder %s15, 0
    %s18 = sadd.s32 %s17, 1
    %s19 = scalar_select %p16, %s17, %s18
    %p22 = pneg %p16
    %p23 = scmp.eq.s32.totalorder %s7, 1
    %p24 = por %p22, %p23
    %p25 = scmp.ne.s32.totalorder %s17, %s20
    %p26 = scmp.eq.s32.totalorder %s7, 0
    %p27 = por %p25, %p26
    %p28 = scmp.ne.s32.totalorder %s17, %s20
    %p29 = scmp.eq.s32.totalorder %s12, 1
    %p30 = por %p28, %p29
    %p31 = scmp.ne.s32.totalorder %s20, %s21
    %p32 = scmp.eq.s32.totalorder %s12, 0
    %p33 = por %p31, %p32
    %p34 = scmp.ne.s32.totalorder %s20, %s21
    %p35 = scmp.eq.s32.totalorder %s13, 1
    %p36 = por %p34, %p35
    %p38 = scmp.ne.s32.totalorder %s21, %s37
    %p39 = scmp.eq.s32.totalorder %s13, 0
    %p40 = por %p38, %p39
    %s41 = ssub.s32 %s7, %s14
    %p42 = scmp.eq.s32.totalorder %s41, 0
    %s44 = sadd.s32 %s43, 1
    %s45 = scalar_select %p42, %s43, %s44
    %p48 = pneg %p42
    %p49 = scmp.eq.s32.totalorder %s7, 1
    %p50 = por %p48, %p49
    %p51 = scmp.ne.s32.totalorder %s43, %s46
    %p52 = scmp.eq.s32.totalorder %s7, 0
    %p53 = por %p51, %p52
    %p54 = scmp.ne.s32.totalorder %s43, %s46
    %p55 = scmp.eq.s32.totalorder %s12, 1
    %p56 = por %p54, %p55
    %p57 = scmp.ne.s32.totalorder %s46, %s47
    %p58 = scmp.eq.s32.totalorder %s12, 0
    %p59 = por %p57, %p58
    %p60 = scmp.ne.s32.totalorder %s46, %s47
    %p61 = scmp.eq.s32.totalorder %s13, 1
    %p62 = por %p60, %p61
    %p64 = scmp.ne.s32.totalorder %s47, %s63
    %p65 = scmp.eq.s32.totalorder %s13, 0
    %p66 = por %p64, %p65
    %p67 = scmp.le.s32.totalorder 1, %s7
    %p68 = scmp.lt.s32.totalorder %s7, 3
    %p69 = pnand %p67, %p68
    %p70 = pneg %p69
    // Predicated region
    $region9: #{tpu_custom_call.1} parent=5 // pred_check
      _
    $region10: #{tpu_custom_call.1} parent=5 // pred_check_branch
      %72 = sbr.rel (%p69) target = $region12
    $region11: #{tpu_custom_call.1} parent=5 // pred_region
      %s73 = ssub.s32 %s7, 1
    $region12: #{tpu_custom_call.1} parent=5 // pred_fallthru
      _
    %p74 = scmp.lt.s32.totalorder %s7, 2
    // Predicated region
    $region13: #{tpu_custom_call.1} parent=5 // pred_check
      %p75 = pneg %p74
    $region14: #{tpu_custom_call.1} parent=5 // pred_check_branch
      %77 = sbr.rel (%p75) target = $region16
    $region15: #{tpu_custom_call.1} parent=5 // pred_region
      // Predicated region
      $region17: #{tpu_custom_call.1} parent=15 // pred_check
        %p78 = pneg %p27
      $region18: #{tpu_custom_call.1} parent=15 // pred_check_branch
        %80 = sbr.rel (%p78) target = $region20
      $region19: #{tpu_custom_call.1} parent=15 // pred_region
        %s81 = smul.u32 2, %s7
        %p82 = scmp.lt.s32.totalorder %s81, 3
        %s83 = scalar_select %p82, %s81, 3
        %s84 = smul.addr %s83, 8
        %s85 = scalar_lea.vmem %s0, %s84
        %s86 = smul.u32 2, %s7
      $region20: #{tpu_custom_call.1} parent=15 // pred_fallthru
        _
    $region16: #{tpu_custom_call.1} parent=5 // pred_fallthru
      _
    %p87 = scmp.le.s32.totalorder 1, %s7
    %p88 = scmp.lt.s32.totalorder %s7, 3
    %p89 = pnand %p87, %p88
    %p90 = pneg %p89
    // Predicated region
    $region21: #{tpu_custom_call.1} parent=5 // pred_check
      _
    $region22: #{tpu_custom_call.1} parent=5 // pred_check_branch
      %92 = sbr.rel (%p89) target = $region24
    $region23: #{tpu_custom_call.1} parent=5 // pred_region
      %s93 = ssub.s32 %s7, 1
      %s94 = smul.u32 2, %s12
      %p95 = scmp.lt.s32.totalorder %s94, 3
      %s96 = scalar_select %p95, %s94, 3
      %s97 = smul.addr %s96, 8
      %s98 = scalar_lea.vmem %s0, %s97
      %p99 = pneg %p33
      %p100 = pneg %p30
      %p101 = pneg %p59
      %p102 = pneg %p56
      %s103 = smul.u32 2, %s12
      %p104 = scmp.lt.s32.totalorder %s103, 3
      %s105 = scalar_select %p104, %s103, 3
      %s106 = smul.addr %s105, 8
      %s107 = scalar_lea.vmem %s1, %s106
      %s108 = smul.u32 2, %s12
      %p109 = scmp.lt.s32.totalorder %s108, 3
      %s110 = scalar_select %p109, %s108, 3
      %s111 = smul.addr %s110, 8
      %s112 = scalar_lea.vmem %s0, %s111
      %s113 = smul.u32 2, %s12
      %s114 = smul.u32 2, %s12
      %p115 = scmp.lt.s32.totalorder %s114, 3
      %s116 = scalar_select %p115, %s114, 3
      %s117 = smul.addr %s116, 8
      %s118 = scalar_lea.vmem %s1, %s117
      %s119 = smul.u32 2, %s12
      %v120 = vld [vmem:[%s112] sm:$0xff]
      %v121 = vld [vmem:[%s112 + $0x8] sm:$0xff]
      %vm124 = vcmask 1040384
      %v125 = vrot.slane %v120, 7
      %v126 = vrot.slane %v121, 7
      %v127 = vsel %vm124, %v125, %v126
      %v130 = vsel %vm124, 0.0, %v125
      %vm131 = vcmask 1046528
      %v132 = vrot.slane %v120, 1
      %v133 = vrot.slane %v121, 1
      %v134 = vsel %vm131, %v132, %v133
      %v137 = vsel %vm131, %v133, 0.0
      %138 = vrot.lane.b32.xlu0 %v120, 1
      %v139 = vpop.permute.xlu0 %138
      %140 = vrot.lane.b32.xlu0 %v121, 1
      %v141 = vpop.permute.xlu0 %140
      %vm144 = vcmask 7168
      %v145 = vsel %vm144, 0.0, %v139
      %v146 = vsel %vm144, 0.0, %v141
      %147 = vrot.lane.b32.xlu0 %v120, 127
      %v148 = vpop.permute.xlu0 %147
      %149 = vrot.lane.b32.xlu0 %v121, 127
      %v150 = vpop.permute.xlu0 %149
      %vm153 = vcmask 121856
      %v154 = vsel %vm153, %v148, 0.0
      %v155 = vsel %vm153, %v150, 0.0
      %v156 = vlaneseq
      %v157 = vand.u32 %v156, 127
      %v158 = vlaneseq
      %v159 = vshrl.u32 %v158, 7
      %v160 = vadd.s32 %v159, 8
      %vm161 = vcmp.ne.s32.totalorder %v157, 0
      %v162 = vsel %vm161, 1.0, 0.0
      %vm163 = vcmp.ne.s32.totalorder %v157, 15
      %v164 = vsel %vm163, 1.0, 0.0
      %vm165 = vcmp.lt.s32.totalorder %v159, 0
      %v166 = vsub.s32 0, %v159
      %v167 = vsel %vm165, %v166, %v159
      %v168 = vshrl.u32 %v167, 4
      %v169 = vand.u32 %v167, 15
      %v170 = vsub.s32 0, %v169
      %v171 = vsel %vm165, %v170, %v169
      %vm172 = vcmp.lt.s32.totalorder %v160, 0
      %v173 = vsub.s32 0, %v160
      %v174 = vsel %vm172, %v173, %v160
      %v175 = vshrl.u32 %v174, 4
      %v176 = vand.u32 %v174, 15
      %v177 = vsub.s32 0, %v176
      %v178 = vsel %vm172, %v177, %v176
      %vm179 = vcmp.ne.s32.totalorder %v171, 0
      %vm180 = vcmp.ne.s32.totalorder %v178, 0
      %vm181 = vcmp.lt.s32.totalorder %v171, 0
      %vm182 = vcmp.lt.s32.totalorder %v178, 0
      %vm183 = vmand %vm181, %vm179
      %vm184 = vmand %vm182, %vm180
      %v185 = vadd.s32 %v171, 16
      %v186 = vadd.s32 %v178, 16
      %v187 = vsel %vm183, %v185, %v171
      %v188 = vsel %vm184, %v186, %v178
      %vm189 = vcmp.ne.s32.totalorder %v187, 0
      %vm190 = vcmp.ne.s32.totalorder %v188, 0
      %v191 = vsel %vm189, 1.0, 0.0
      %v192 = vsel %vm190, 1.0, 0.0
      %vm193 = vcmp.ne.s32.totalorder %v187, 15
      %vm194 = vcmp.ne.s32.totalorder %v188, 15
      %v195 = vsel %vm193, 1.0, 0.0
      %v196 = vsel %vm194, 1.0, 0.0
      %v197 = vmul.f32 %v130, %v191
      %v198 = vmul.f32 %v127, %v192
      %v199 = vmul.f32 %v134, %v195
      %v200 = vmul.f32 %v137, %v196
      %v201 = vadd.f32 %v197, %v199
      %v202 = vadd.f32 %v198, %v200
      %v203 = vmul.f32 %v145, %v162
      %v204 = vmul.f32 %v146, %v162
      %v205 = vadd.f32 %v201, %v203
      %v206 = vadd.f32 %v202, %v204
      %v207 = vmul.f32 %v154, %v164
      %v208 = vmul.f32 %v155, %v164
      %v209 = vadd.f32 %v205, %v207
      %v210 = vadd.f32 %v206, %v208
      %v211 = vmul.f32 %v120, -4.0
      %v212 = vmul.f32 %v121, -4.0
      %v213 = vadd.f32 %v209, %v211
      %v214 = vadd.f32 %v210, %v212
      %vm215 = vcmask 130048
      %216 = vst.msk [vmem:[%s118] sm:$0xff] %vm215, %v213
      %217 = vst.msk [vmem:[%s118 + $0x8] sm:$0xff] %vm215, %v214
      %s218 = smul.u32 2, %s12
      %p219 = scmp.lt.s32.totalorder %s218, 3
      %s220 = scalar_select %p219, %s218, 3
      %s221 = smul.addr %s220, 8
      %s222 = scalar_lea.vmem %s1, %s221
      // Predicated region
      $region25: #{tpu_custom_call.1} parent=23 // pred_check
        %p223 = pneg %p56
      $region26: #{tpu_custom_call.1} parent=23 // pred_check_branch
        %225 = sbr.rel (%p223) target = $region28
      $region27: #{tpu_custom_call.1} parent=23 // pred_region
        %s226 = smul.u32 2, %s12
      $region28: #{tpu_custom_call.1} parent=23 // pred_fallthru
        _
    $region24: #{tpu_custom_call.1} parent=5 // pred_fallthru
      _
    %p227 = scmp.le.s32.totalorder 2, %s7
    // Predicated region
    $region29: #{tpu_custom_call.1} parent=5 // pred_check
      %p228 = pneg %p227
    $region30: #{tpu_custom_call.1} parent=5 // pred_check_branch
      %230 = sbr.rel (%p228) target = $region32
    $region31: #{tpu_custom_call.1} parent=5 // pred_region
      %s231 = ssub.s32 %s7, 2
      // Predicated region
      $region33: #{tpu_custom_call.1} parent=31 // pred_check
        %p232 = pneg %p62
      $region34: #{tpu_custom_call.1} parent=31 // pred_check_branch
        %234 = sbr.rel (%p232) target = $region36
      $region35: #{tpu_custom_call.1} parent=31 // pred_region
        %s235 = smul.u32 2, %s13
        %p236 = scmp.lt.s32.totalorder %s235, 3
        %s237 = scalar_select %p236, %s235, 3
        %s238 = smul.addr %s237, 8
        %s239 = scalar_lea.vmem %s1, %s238
      $region36: #{tpu_custom_call.1} parent=31 // pred_fallthru
        _
    $region32: #{tpu_custom_call.1} parent=5 // pred_fallthru
      _
  $region6: #{tpu_custom_call.1} parent=0 // loop_footer
    %s11 = sadd.s32 1, %s7
  $region7: #{tpu_custom_call.1} parent=0 // loop_footer_branch
    %6 = sbr.rel target = $region3
  $region8: #{tpu_custom_call.1} parent=0 // loop_exit
    _

</llo_original>
